<compile_context>
chip_gen: v5e
topology: v5e:2x2
jax: 0.10.0
libtpu: 0.0.40
codegen_flags: <defaults>
</compile_context>

<pallas_src>
import math

import jax
import jax.numpy as jnp
from jax.experimental import pallas as pl
from jax.experimental.pallas import tpu as pltpu

BN_EPS = 1e-5
LANE = 128


def _round_up(x, m):
    return ((x + m - 1) // m) * m


def _vmem_limit_bytes():
    """Generation-dependent VMEM scoped limit (v7x has 64 MiB, v5e/v6e have 128 MiB)."""
    try:
        cap = getattr(pltpu.get_tpu_info(), "vmem_capacity_bytes", None)
    except Exception:
        cap = None
    if cap is None or cap <= 64 * 1024 * 1024:
        return 32 * 1024 * 1024          # safe on v7x (64 MiB physical VMEM)
    return 96 * 1024 * 1024              # v5e / v6e (128 MiB physical VMEM)


def conv_bn_relu_layer_nhwc(x, w, gamma, beta, stride, *, tile_m=None):
    """x: [N, H, W, Cin] f32; w: [Cout, Cin, KH, KW] f32 -> [N, OH, OW, Cout] f32.

    Conv2d (valid padding, no bias) -> BatchNorm2d with batch statistics -> ReLU,
    fused into one pallas_call.
    """
    N, H, W, Cin = x.shape
    Cout, _, KH, KW = w.shape
    OH = (H - KH) // stride + 1
    OW = (W - KW) // stride + 1
    M = N * OH * OW
    K = Cin * KH * KW

    vmem_limit = _vmem_limit_bytes()
    if tile_m is None:
        tile_m = 1024 if vmem_limit > 48 * 1024 * 1024 else 512

    # im2col from channel-last data, in bf16 (no big activation transpose, half the bytes).
    # K order is (kh, kw, cin) with cin fastest.
    xb = x.astype(jnp.bfloat16)
    cols = []
    for kh in range(KH):
        for kw in range(KW):
            cols.append(
                xb[:, kh:kh + (OH - 1) * stride + 1:stride,
                       kw:kw + (OW - 1) * stride + 1:stride, :]
            )
    patches = jnp.concatenate(cols, axis=-1).reshape(M, K)

    # TPU-friendly padding: lane-dense Cout; bf16 sublane-packed (x16) K and M tile.
    # M padding is minimized: ceil-split M across tiles, each tile rounded to 16 rows.
    Kp = _round_up(K, 16)
    Cp = _round_up(Cout, LANE)
    M16 = _round_up(M, 16)
    num_tiles = (M16 + tile_m - 1) // tile_m
    tm = _round_up((M16 + num_tiles - 1) // num_tiles, 16)
    Mp = tm * num_tiles

    patches = jnp.pad(patches, ((0, Mp - M), (0, Kp - K)))
    w2 = w.transpose(2, 3, 1, 0).reshape(K, Cout)                  # [(kh, kw, cin), Cout]
    w2 = jnp.pad(w2, ((0, Kp - K), (0, Cp - Cout))).astype(jnp.bfloat16)
    # Zero-padded gamma -> scale 0 on padded channels (despite inv_std ~ 1/sqrt(eps)).
    gamma_p = jnp.pad(gamma, (0, Cp - Cout)).reshape(1, Cp)
    beta_p = jnp.pad(beta, (0, Cp - Cout)).reshape(1, Cp)

    # Padded rows/channels contribute exactly zero to the sums, so dividing by the real
    # M yields correct train-mode batch statistics.
    inv_m = 1.0 / M

    def kernel(gamma_ref, beta_ref, p_ref, w_ref, o_ref,
               sum_ref, sq_ref, scale_ref, shift_ref):
        phase = pl.program_id(0)
        i = pl.program_id(1)

        @pl.when((phase == 0) & (i == 0))
        def _init():
            sum_ref[...] = jnp.zeros_like(sum_ref)
            sq_ref[...] = jnp.zeros_like(sq_ref)

        conv = jnp.dot(p_ref[...], w_ref[...], preferred_element_type=jnp.float32)

        @pl.when(phase == 0)
        def _accumulate_stats():
            sum_ref[...] += jnp.sum(conv, axis=0, keepdims=True)
            sq_ref[...] += jnp.sum(conv * conv, axis=0, keepdims=True)

        @pl.when((phase == 0) & (i == pl.num_programs(1) - 1))
        def _finalize_bn():
            mean = sum_ref[...] * inv_m
            # Biased variance, as nn.BatchNorm2d normalization. E[x^2]-E[x]^2 in f32;
            # clamp guards the (rare) catastrophic cancellation when |mean| >> std.
            var = jnp.maximum(sq_ref[...] * inv_m - mean * mean, 0.0)
            inv_std = jax.lax.rsqrt(var + BN_EPS)                  # EUP slot (free)
            scale = gamma_ref[...] * inv_std
            scale_ref[...] = scale
            shift_ref[...] = beta_ref[...] - mean * scale

        @pl.when(phase == 1)
        def _apply_bn_relu():
            o_ref[...] = jnp.maximum(conv * scale_ref[...] + shift_ref[...], 0.0)

    flops = 2 * (2 * Mp * Kp * Cp)            # matmul is recomputed in phase 1
    bytes_accessed = (2 * Mp * Kp * 2         # bf16 patches read once per phase
                      + Kp * Cp * 2           # bf16 weights (resident)
                      + Mp * Cp * 4           # f32 output written once
                      + 4 * Cp * 4)

    out = pl.pallas_call(
        kernel,
        out_shape=jax.ShapeDtypeStruct((Mp, Cp), jnp.float32),
        grid=(2, num_tiles),                  # (phase, m_tile); phase 0 = stats, 1 = apply
        in_specs=[
            pl.BlockSpec((1, Cp), lambda p, i: (0, 0)),       # gamma (resident)
            pl.BlockSpec((1, Cp), lambda p, i: (0, 0)),       # beta  (resident)
            pl.BlockSpec((tm, Kp), lambda p, i: (i, 0)),      # im2col patches (streamed)
            pl.BlockSpec((Kp, Cp), lambda p, i: (0, 0)),      # weights (resident)
        ],
        # Phase 0 pins the output index to block 0 -> no spurious write-backs during the
        # stats sweep; block 0 is fully overwritten at the first phase-1 step before its
        # first (and only) write-back.
        out_specs=pl.BlockSpec((tm, Cp), lambda p, i: (i * p, 0)),
        scratch_shapes=[
            pltpu.VMEM((1, Cp), jnp.float32),   # channel sum
            pltpu.VMEM((1, Cp), jnp.float32),   # channel sum of squares
            pltpu.VMEM((1, Cp), jnp.float32),   # BN scale  (gamma * inv_std)
            pltpu.VMEM((1, Cp), jnp.float32),   # BN shift  (beta - mean * scale)
        ],
        compiler_params=pltpu.CompilerParams(
            # phase axis is a hard dependency (stats before apply); the M axis carries the
            # resident stats accumulator + scale/shift scratch, so both stay sequential.
            dimension_semantics=("arbitrary", "arbitrary"),
            vmem_limit_bytes=vmem_limit,
        ),
        cost_estimate=pl.CostEstimate(
            flops=flops, transcendentals=Cp, bytes_accessed=bytes_accessed),
    )(gamma_p, beta_p, patches, w2)

    return out[:M].reshape(N, OH, OW, Cp)[:, :, :, :Cout]


class ConvBlockPallas:
    """JAX/Pallas port of the PyTorch ConvBlock (conv -> batchnorm -> relu stack)."""

    def __init__(self, input_dims, filter_size, filter_stride, filter_channels, key):
        self.input_dims = input_dims
        self.filter_size = filter_size
        self.filter_stride = filter_stride
        self.filter_channels = filter_channels
        self.output_dim = filter_channels[-1]

        self.params = []
        for i, filters in enumerate(filter_channels):
            in_channels = 1 if i == 0 else filter_channels[i - 1]
            key, k_w = jax.random.split(key)
            fan_in = in_channels * filter_size * filter_size
            bound = 1.0 / math.sqrt(fan_in)
            # PyTorch Conv2d default init: U(-1/sqrt(fan_in), 1/sqrt(fan_in)).
            w = jax.random.uniform(k_w, (filters, in_channels, filter_size, filter_size),
                                   minval=-bound, maxval=bound, dtype=jnp.float32)
            # Conv bias not instantiated: exactly cancelled by train-mode BatchNorm.
            gamma = jnp.ones((filters,), jnp.float32)   # BatchNorm2d affine init
            beta = jnp.zeros((filters,), jnp.float32)
            self.params.append((w, gamma, beta))

    def __call__(self, x):
        # NCHW at the module boundary, NHWC internally (avoids per-layer transposes).
        x = jnp.transpose(x, (0, 2, 3, 1))
        for (w, gamma, beta) in self.params:
            x = conv_bn_relu_layer_nhwc(x, w, gamma, beta, self.filter_stride)
        return jnp.transpose(x, (0, 3, 1, 2))


if __name__ == "__main__":
    key = jax.random.PRNGKey(0)
    k_params, k_x = jax.random.split(key)

    input_dims = (16, 16)        # (L_R, d_R)
    filter_size = 3
    filter_stride = 2
    filter_channels = [4, 8]

    block = ConvBlockPallas(input_dims, filter_size, filter_stride, filter_channels,
                            k_params)

    # NCHW input with a single channel, as the reference module expects.
    x = jax.random.normal(k_x, (2, 1, input_dims[0], input_dims[1]), dtype=jnp.float32)

    fwd = jax.jit(lambda a: block(a))        # single dispatch for the whole stack
    out = fwd(x)
    out = jax.block_until_ready(out)
    assert out.shape == (2, filter_channels[-1], 3, 3), out.shape
    print("KERNEL_OK")
</pallas_src>

<mosaic_0001>
module attributes {stable_mosaic.version = 11 : i64} {
  func.func @kernel(%arg0: i32, %arg1: i32, %arg2: memref<1x128xf32, #tpu.memory_space<vmem>>, %arg3: memref<1x128xf32, #tpu.memory_space<vmem>>, %arg4: memref<112x16xbf16, #tpu.memory_space<vmem>>, %arg5: memref<16x128xbf16, #tpu.memory_space<vmem>>, %arg6: memref<112x128xf32, #tpu.memory_space<vmem>>, %arg7: memref<1x128xf32, #tpu.memory_space<vmem>>, %arg8: memref<1x128xf32, #tpu.memory_space<vmem>>, %arg9: memref<1x128xf32, #tpu.memory_space<vmem>>, %arg10: memref<1x128xf32, #tpu.memory_space<vmem>>) attributes {dimension_semantics = [#tpu.dimension_semantics<arbitrary>, #tpu.dimension_semantics<arbitrary>], iteration_bounds = array<i64: 2, 1>, scalar_prefetch = 0 : i64, scratch_operands = 4 : i64, tpu.core_type = #tpu.core_type<tc>, window_params = [{pipeline_mode = #tpu.pipeline_mode<synchronous>, transform_indices = @transform_0, window_bounds = array<i64: 1, 128>}, {pipeline_mode = #tpu.pipeline_mode<synchronous>, transform_indices = @transform_1, window_bounds = array<i64: 1, 128>}, {transform_indices = @transform_2, window_bounds = array<i64: 112, 16>}, {pipeline_mode = #tpu.pipeline_mode<synchronous>, transform_indices = @transform_3, window_bounds = array<i64: 16, 128>}, {transform_indices = @transform_4, window_bounds = array<i64: 112, 128>}]} {
    %c0_i32 = arith.constant 0 : i32
    %0 = arith.cmpi eq, %arg0, %c0_i32 : i32
    %c0_i32_0 = arith.constant 0 : i32
    %1 = arith.cmpi eq, %arg1, %c0_i32_0 : i32
    %2 = arith.andi %0, %1 : i1
    %3 = arith.extui %2 : i1 to i32
    %c0_i32_1 = arith.constant 0 : i32
    %4 = arith.cmpi ne, %3, %c0_i32_1 : i32
    scf.if %4 {
      %cst_11 = arith.constant 0.000000e+00 : f32
      %19 = vector.broadcast %cst_11 : f32 to vector<1x128xf32>
      %c0_12 = arith.constant 0 : index
      %c0_13 = arith.constant 0 : index
      %20 = vector.load %arg7[%c0_12, %c0_13] : memref<1x128xf32, #tpu.memory_space<vmem>>, vector<1x128xf32>
      tpu.vector_store %arg7[%c0_12, %c0_13], %19 {strides = array<i32>} : memref<1x128xf32, #tpu.memory_space<vmem>>, vector<1x128xf32>,
      %cst_14 = arith.constant 0.000000e+00 : f32
      %21 = vector.broadcast %cst_14 : f32 to vector<1x128xf32>
      %c0_15 = arith.constant 0 : index
      %c0_16 = arith.constant 0 : index
      %22 = vector.load %arg8[%c0_15, %c0_16] : memref<1x128xf32, #tpu.memory_space<vmem>>, vector<1x128xf32>
      tpu.vector_store %arg8[%c0_15, %c0_16], %21 {strides = array<i32>} : memref<1x128xf32, #tpu.memory_space<vmem>>, vector<1x128xf32>,
    } else {
    }
    %c0 = arith.constant 0 : index
    %c0_2 = arith.constant 0 : index
    %5 = vector.load %arg4[%c0, %c0_2] : memref<112x16xbf16, #tpu.memory_space<vmem>>, vector<112x16xbf16>
    %c0_3 = arith.constant 0 : index
    %c0_4 = arith.constant 0 : index
    %6 = vector.load %arg5[%c0_3, %c0_4] : memref<16x128xbf16, #tpu.memory_space<vmem>>, vector<16x128xbf16>
    %cst = arith.constant dense<0.000000e+00> : vector<112x128xf32>
    %7 = tpu.matmul %5, %6, %cst {dimension_numbers = #tpu.dot_dimension_numbers<[1], [0], [0], [1], [0, 0, 1, 1], [], []>} : vector<112x16xbf16>, vector<16x128xbf16>, vector<112x128xf32> -> vector<112x128xf32>
    %c0_i32_5 = arith.constant 0 : i32
    %8 = arith.cmpi eq, %arg0, %c0_i32_5 : i32
    %9 = arith.extui %8 : i1 to i32
    %c0_i32_6 = arith.constant 0 : i32
    %10 = arith.cmpi ne, %9, %c0_i32_6 : i32
    scf.if %10 {
      %c0_11 = arith.constant 0 : index
      %c0_12 = arith.constant 0 : index
      %19 = vector.load %arg7[%c0_11, %c0_12] : memref<1x128xf32, #tpu.memory_space<vmem>>, vector<1x128xf32>
      %cst_13 = arith.constant dense<0.000000e+00> : vector<128xf32>
      %20 = vector.multi_reduction <add>, %7, %cst_13 [0] : vector<112x128xf32> to vector<128xf32>
      %21 = vector.shape_cast %20 : vector<128xf32> to vector<1x128xf32>
      %22 = arith.addf %19, %21 : vector<1x128xf32>
      %c0_14 = arith.constant 0 : index
      %c0_15 = arith.constant 0 : index
      %23 = vector.load %arg7[%c0_14, %c0_15] : memref<1x128xf32, #tpu.memory_space<vmem>>, vector<1x128xf32>
      tpu.vector_store %arg7[%c0_14, %c0_15], %22 {strides = array<i32>} : memref<1x128xf32, #tpu.memory_space<vmem>>, vector<1x128xf32>,
      %c0_16 = arith.constant 0 : index
      %c0_17 = arith.constant 0 : index
      %24 = vector.load %arg8[%c0_16, %c0_17] : memref<1x128xf32, #tpu.memory_space<vmem>>, vector<1x128xf32>
      %25 = arith.mulf %7, %7 : vector<112x128xf32>
      %cst_18 = arith.constant dense<0.000000e+00> : vector<128xf32>
      %26 = vector.multi_reduction <add>, %25, %cst_18 [0] : vector<112x128xf32> to vector<128xf32>
      %27 = vector.shape_cast %26 : vector<128xf32> to vector<1x128xf32>
      %28 = arith.addf %24, %27 : vector<1x128xf32>
      %c0_19 = arith.constant 0 : index
      %c0_20 = arith.constant 0 : index
      %29 = vector.load %arg8[%c0_19, %c0_20] : memref<1x128xf32, #tpu.memory_space<vmem>>, vector<1x128xf32>
      tpu.vector_store %arg8[%c0_19, %c0_20], %28 {strides = array<i32>} : memref<1x128xf32, #tpu.memory_space<vmem>>, vector<1x128xf32>,
    } else {
    }
    %c0_i32_7 = arith.constant 0 : i32
    %11 = arith.cmpi eq, %arg0, %c0_i32_7 : i32
    %c0_i32_8 = arith.constant 0 : i32
    %12 = arith.cmpi eq, %arg1, %c0_i32_8 : i32
    %13 = arith.andi %11, %12 : i1
    %14 = arith.extui %13 : i1 to i32
    %c0_i32_9 = arith.constant 0 : i32
    %15 = arith.cmpi ne, %14, %c0_i32_9 : i32
    scf.if %15 {
      %c0_11 = arith.constant 0 : index
      %c0_12 = arith.constant 0 : index
      %19 = vector.load %arg7[%c0_11, %c0_12] : memref<1x128xf32, #tpu.memory_space<vmem>>, vector<1x128xf32>
      %cst_13 = arith.constant 0.0102040814 : f32
      %20 = vector.broadcast %cst_13 : f32 to vector<1x128xf32>
      %21 = arith.mulf %19, %20 : vector<1x128xf32>
      %c0_14 = arith.constant 0 : index
      %c0_15 = arith.constant 0 : index
      %22 = vector.load %arg8[%c0_14, %c0_15] : memref<1x128xf32, #tpu.memory_space<vmem>>, vector<1x128xf32>
      %cst_16 = arith.constant 0.0102040814 : f32
      %23 = vector.broadcast %cst_16 : f32 to vector<1x128xf32>
      %24 = arith.mulf %22, %23 : vector<1x128xf32>
      %25 = arith.mulf %21, %21 : vector<1x128xf32>
      %26 = arith.subf %24, %25 : vector<1x128xf32>
      %cst_17 = arith.constant 0.000000e+00 : f32
      %27 = vector.broadcast %cst_17 : f32 to vector<1x128xf32>
      %28 = arith.maximumf %26, %27 : vector<1x128xf32>
      %cst_18 = arith.constant 9.99999974E-6 : f32
      %29 = vector.broadcast %cst_18 : f32 to vector<1x128xf32>
      %30 = arith.addf %28, %29 : vector<1x128xf32>
      %31 = math.rsqrt %30 : vector<1x128xf32>
      %c0_19 = arith.constant 0 : index
      %c0_20 = arith.constant 0 : index
      %32 = vector.load %arg2[%c0_19, %c0_20] : memref<1x128xf32, #tpu.memory_space<vmem>>, vector<1x128xf32>
      %33 = arith.mulf %32, %31 : vector<1x128xf32>
      %c0_21 = arith.constant 0 : index
      %c0_22 = arith.constant 0 : index
      %34 = vector.load %arg9[%c0_21, %c0_22] : memref<1x128xf32, #tpu.memory_space<vmem>>, vector<1x128xf32>
      tpu.vector_store %arg9[%c0_21, %c0_22], %33 {strides = array<i32>} : memref<1x128xf32, #tpu.memory_space<vmem>>, vector<1x128xf32>,
      %c0_23 = arith.constant 0 : index
      %c0_24 = arith.constant 0 : index
      %35 = vector.load %arg3[%c0_23, %c0_24] : memref<1x128xf32, #tpu.memory_space<vmem>>, vector<1x128xf32>
      %36 = arith.mulf %21, %33 : vector<1x128xf32>
      %37 = arith.subf %35, %36 : vector<1x128xf32>
      %c0_25 = arith.constant 0 : index
      %c0_26 = arith.constant 0 : index
      %38 = vector.load %arg10[%c0_25, %c0_26] : memref<1x128xf32, #tpu.memory_space<vmem>>, vector<1x128xf32>
      tpu.vector_store %arg10[%c0_25, %c0_26], %37 {strides = array<i32>} : memref<1x128xf32, #tpu.memory_space<vmem>>, vector<1x128xf32>,
    } else {
    }
    %c1_i32 = arith.constant 1 : i32
    %16 = arith.cmpi eq, %arg0, %c1_i32 : i32
    %17 = arith.extui %16 : i1 to i32
    %c0_i32_10 = arith.constant 0 : i32
    %18 = arith.cmpi ne, %17, %c0_i32_10 : i32
    scf.if %18 {
      %c0_11 = arith.constant 0 : index
      %c0_12 = arith.constant 0 : index
      %19 = vector.load %arg9[%c0_11, %c0_12] : memref<1x128xf32, #tpu.memory_space<vmem>>, vector<1x128xf32>
      %20 = vector.broadcast %19 : vector<1x128xf32> to vector<112x128xf32>
      %21 = arith.mulf %7, %20 : vector<112x128xf32>
      %c0_13 = arith.constant 0 : index
      %c0_14 = arith.constant 0 : index
      %22 = vector.load %arg10[%c0_13, %c0_14] : memref<1x128xf32, #tpu.memory_space<vmem>>, vector<1x128xf32>
      %23 = vector.broadcast %22 : vector<1x128xf32> to vector<112x128xf32>
      %24 = arith.addf %21, %23 : vector<112x128xf32>
      %cst_15 = arith.constant 0.000000e+00 : f32
      %25 = vector.broadcast %cst_15 : f32 to vector<112x128xf32>
      %26 = arith.maximumf %24, %25 : vector<112x128xf32>
      %c0_16 = arith.constant 0 : index
      %c0_17 = arith.constant 0 : index
      %27 = vector.load %arg6[%c0_16, %c0_17] : memref<112x128xf32, #tpu.memory_space<vmem>>, vector<112x128xf32>
      tpu.vector_store %arg6[%c0_16, %c0_17], %26 {strides = array<i32>} : memref<112x128xf32, #tpu.memory_space<vmem>>, vector<112x128xf32>,
    } else {
    }
    return
  }
  func.func @transform_0(%arg0: i32, %arg1: i32) -> (i32, i32) {
    %c0_i32 = arith.constant 0 : i32
    %c0_i32_0 = arith.constant 0 : i32
    %c0_i32_1 = arith.constant 0 : i32
    return %c0_i32, %c0_i32_0 : i32, i32
  }
  func.func @transform_1(%arg0: i32, %arg1: i32) -> (i32, i32) {
    %c0_i32 = arith.constant 0 : i32
    %c0_i32_0 = arith.constant 0 : i32
    %c0_i32_1 = arith.constant 0 : i32
    return %c0_i32, %c0_i32_0 : i32, i32
  }
  func.func @transform_2(%arg0: i32, %arg1: i32) -> (i32, i32) {
    %c0_i32 = arith.constant 0 : i32
    %c0_i32_0 = arith.constant 0 : i32
    return %arg1, %c0_i32 : i32, i32
  }
  func.func @transform_3(%arg0: i32, %arg1: i32) -> (i32, i32) {
    %c0_i32 = arith.constant 0 : i32
    %c0_i32_0 = arith.constant 0 : i32
    %c0_i32_1 = arith.constant 0 : i32
    return %c0_i32, %c0_i32_0 : i32, i32
  }
  func.func @transform_4(%arg0: i32, %arg1: i32) -> (i32, i32) {
    %0 = arith.muli %arg1, %arg0 : i32
    %c0_i32 = arith.constant 0 : i32
    %c0_i32_0 = arith.constant 0 : i32
    return %0, %c0_i32 : i32, i32
  }
}

module attributes {stable_mosaic.version = 11 : i64} {
  func.func @kernel(%arg0: i32, %arg1: i32, %arg2: memref<1x128xf32, #tpu.memory_space<vmem>>, %arg3: memref<1x128xf32, #tpu.memory_space<vmem>>, %arg4: memref<32x48xbf16, #tpu.memory_space<vmem>>, %arg5: memref<48x128xbf16, #tpu.memory_space<vmem>>, %arg6: memref<32x128xf32, #tpu.memory_space<vmem>>, %arg7: memref<1x128xf32, #tpu.memory_space<vmem>>, %arg8: memref<1x128xf32, #tpu.memory_space<vmem>>, %arg9: memref<1x128xf32, #tpu.memory_space<vmem>>, %arg10: memref<1x128xf32, #tpu.memory_space<vmem>>) attributes {dimension_semantics = [#tpu.dimension_semantics<arbitrary>, #tpu.dimension_semantics<arbitrary>], iteration_bounds = array<i64: 2, 1>, scalar_prefetch = 0 : i64, scratch_operands = 4 : i64, tpu.core_type = #tpu.core_type<tc>, window_params = [{pipeline_mode = #tpu.pipeline_mode<synchronous>, transform_indices = @transform_0, window_bounds = array<i64: 1, 128>}, {pipeline_mode = #tpu.pipeline_mode<synchronous>, transform_indices = @transform_1, window_bounds = array<i64: 1, 128>}, {transform_indices = @transform_2, window_bounds = array<i64: 32, 48>}, {pipeline_mode = #tpu.pipeline_mode<synchronous>, transform_indices = @transform_3, window_bounds = array<i64: 48, 128>}, {transform_indices = @transform_4, window_bounds = array<i64: 32, 128>}]} {
    %c0_i32 = arith.constant 0 : i32
    %0 = arith.cmpi eq, %arg0, %c0_i32 : i32
    %c0_i32_0 = arith.constant 0 : i32
    %1 = arith.cmpi eq, %arg1, %c0_i32_0 : i32
    %2 = arith.andi %0, %1 : i1
    %3 = arith.extui %2 : i1 to i32
    %c0_i32_1 = arith.constant 0 : i32
    %4 = arith.cmpi ne, %3, %c0_i32_1 : i32
    scf.if %4 {
      %cst_11 = arith.constant 0.000000e+00 : f32
      %19 = vector.broadcast %cst_11 : f32 to vector<1x128xf32>
      %c0_12 = arith.constant 0 : index
      %c0_13 = arith.constant 0 : index
      %20 = vector.load %arg7[%c0_12, %c0_13] : memref<1x128xf32, #tpu.memory_space<vmem>>, vector<1x128xf32>
      tpu.vector_store %arg7[%c0_12, %c0_13], %19 {strides = array<i32>} : memref<1x128xf32, #tpu.memory_space<vmem>>, vector<1x128xf32>,
      %cst_14 = arith.constant 0.000000e+00 : f32
      %21 = vector.broadcast %cst_14 : f32 to vector<1x128xf32>
      %c0_15 = arith.constant 0 : index
      %c0_16 = arith.constant 0 : index
      %22 = vector.load %arg8[%c0_15, %c0_16] : memref<1x128xf32, #tpu.memory_space<vmem>>, vector<1x128xf32>
      tpu.vector_store %arg8[%c0_15, %c0_16], %21 {strides = array<i32>} : memref<1x128xf32, #tpu.memory_space<vmem>>, vector<1x128xf32>,
    } else {
    }
    %c0 = arith.constant 0 : index
    %c0_2 = arith.constant 0 : index
    %5 = vector.load %arg4[%c0, %c0_2] : memref<32x48xbf16, #tpu.memory_space<vmem>>, vector<32x48xbf16>
    %c0_3 = arith.constant 0 : index
    %c0_4 = arith.constant 0 : index
    %6 = vector.load %arg5[%c0_3, %c0_4] : memref<48x128xbf16, #tpu.memory_space<vmem>>, vector<48x128xbf16>
    %cst = arith.constant dense<0.000000e+00> : vector<32x128xf32>
    %7 = tpu.matmul %5, %6, %cst {dimension_numbers = #tpu.dot_dimension_numbers<[1], [0], [0], [1], [0, 0, 1, 1], [], []>} : vector<32x48xbf16>, vector<48x128xbf16>, vector<32x128xf32> -> vector<32x128xf32>
    %c0_i32_5 = arith.constant 0 : i32
    %8 = arith.cmpi eq, %arg0, %c0_i32_5 : i32
    %9 = arith.extui %8 : i1 to i32
    %c0_i32_6 = arith.constant 0 : i32
    %10 = arith.cmpi ne, %9, %c0_i32_6 : i32
    scf.if %10 {
      %c0_11 = arith.constant 0 : index
      %c0_12 = arith.constant 0 : index
      %19 = vector.load %arg7[%c0_11, %c0_12] : memref<1x128xf32, #tpu.memory_space<vmem>>, vector<1x128xf32>
      %cst_13 = arith.constant dense<0.000000e+00> : vector<128xf32>
      %20 = vector.multi_reduction <add>, %7, %cst_13 [0] : vector<32x128xf32> to vector<128xf32>
      %21 = vector.shape_cast %20 : vector<128xf32> to vector<1x128xf32>
      %22 = arith.addf %19, %21 : vector<1x128xf32>
      %c0_14 = arith.constant 0 : index
      %c0_15 = arith.constant 0 : index
      %23 = vector.load %arg7[%c0_14, %c0_15] : memref<1x128xf32, #tpu.memory_space<vmem>>, vector<1x128xf32>
      tpu.vector_store %arg7[%c0_14, %c0_15], %22 {strides = array<i32>} : memref<1x128xf32, #tpu.memory_space<vmem>>, vector<1x128xf32>,
      %c0_16 = arith.constant 0 : index
      %c0_17 = arith.constant 0 : index
      %24 = vector.load %arg8[%c0_16, %c0_17] : memref<1x128xf32, #tpu.memory_space<vmem>>, vector<1x128xf32>
      %25 = arith.mulf %7, %7 : vector<32x128xf32>
      %cst_18 = arith.constant dense<0.000000e+00> : vector<128xf32>
      %26 = vector.multi_reduction <add>, %25, %cst_18 [0] : vector<32x128xf32> to vector<128xf32>
      %27 = vector.shape_cast %26 : vector<128xf32> to vector<1x128xf32>
      %28 = arith.addf %24, %27 : vector<1x128xf32>
      %c0_19 = arith.constant 0 : index
      %c0_20 = arith.constant 0 : index
      %29 = vector.load %arg8[%c0_19, %c0_20] : memref<1x128xf32, #tpu.memory_space<vmem>>, vector<1x128xf32>
      tpu.vector_store %arg8[%c0_19, %c0_20], %28 {strides = array<i32>} : memref<1x128xf32, #tpu.memory_space<vmem>>, vector<1x128xf32>,
    } else {
    }
    %c0_i32_7 = arith.constant 0 : i32
    %11 = arith.cmpi eq, %arg0, %c0_i32_7 : i32
    %c0_i32_8 = arith.constant 0 : i32
    %12 = arith.cmpi eq, %arg1, %c0_i32_8 : i32
    %13 = arith.andi %11, %12 : i1
    %14 = arith.extui %13 : i1 to i32
    %c0_i32_9 = arith.constant 0 : i32
    %15 = arith.cmpi ne, %14, %c0_i32_9 : i32
    scf.if %15 {
      %c0_11 = arith.constant 0 : index
      %c0_12 = arith.constant 0 : index
      %19 = vector.load %arg7[%c0_11, %c0_12] : memref<1x128xf32, #tpu.memory_space<vmem>>, vector<1x128xf32>
      %cst_13 = arith.constant 0.055555556 : f32
      %20 = vector.broadcast %cst_13 : f32 to vector<1x128xf32>
      %21 = arith.mulf %19, %20 : vector<1x128xf32>
      %c0_14 = arith.constant 0 : index
      %c0_15 = arith.constant 0 : index
      %22 = vector.load %arg8[%c0_14, %c0_15] : memref<1x128xf32, #tpu.memory_space<vmem>>, vector<1x128xf32>
      %cst_16 = arith.constant 0.055555556 : f32
      %23 = vector.broadcast %cst_16 : f32 to vector<1x128xf32>
      %24 = arith.mulf %22, %23 : vector<1x128xf32>
      %25 = arith.mulf %21, %21 : vector<1x128xf32>
      %26 = arith.subf %24, %25 : vector<1x128xf32>
      %cst_17 = arith.constant 0.000000e+00 : f32
      %27 = vector.broadcast %cst_17 : f32 to vector<1x128xf32>
      %28 = arith.maximumf %26, %27 : vector<1x128xf32>
      %cst_18 = arith.constant 9.99999974E-6 : f32
      %29 = vector.broadcast %cst_18 : f32 to vector<1x128xf32>
      %30 = arith.addf %28, %29 : vector<1x128xf32>
      %31 = math.rsqrt %30 : vector<1x128xf32>
      %c0_19 = arith.constant 0 : index
      %c0_20 = arith.constant 0 : index
      %32 = vector.load %arg2[%c0_19, %c0_20] : memref<1x128xf32, #tpu.memory_space<vmem>>, vector<1x128xf32>
      %33 = arith.mulf %32, %31 : vector<1x128xf32>
      %c0_21 = arith.constant 0 : index
      %c0_22 = arith.constant 0 : index
      %34 = vector.load %arg9[%c0_21, %c0_22] : memref<1x128xf32, #tpu.memory_space<vmem>>, vector<1x128xf32>
      tpu.vector_store %arg9[%c0_21, %c0_22], %33 {strides = array<i32>} : memref<1x128xf32, #tpu.memory_space<vmem>>, vector<1x128xf32>,
      %c0_23 = arith.constant 0 : index
      %c0_24 = arith.constant 0 : index
      %35 = vector.load %arg3[%c0_23, %c0_24] : memref<1x128xf32, #tpu.memory_space<vmem>>, vector<1x128xf32>
      %36 = arith.mulf %21, %33 : vector<1x128xf32>
      %37 = arith.subf %35, %36 : vector<1x128xf32>
      %c0_25 = arith.constant 0 : index
      %c0_26 = arith.constant 0 : index
      %38 = vector.load %arg10[%c0_25, %c0_26] : memref<1x128xf32, #tpu.memory_space<vmem>>, vector<1x128xf32>
      tpu.vector_store %arg10[%c0_25, %c0_26], %37 {strides = array<i32>} : memref<1x128xf32, #tpu.memory_space<vmem>>, vector<1x128xf32>,
    } else {
    }
    %c1_i32 = arith.constant 1 : i32
    %16 = arith.cmpi eq, %arg0, %c1_i32 : i32
    %17 = arith.extui %16 : i1 to i32
    %c0_i32_10 = arith.constant 0 : i32
    %18 = arith.cmpi ne, %17, %c0_i32_10 : i32
    scf.if %18 {
      %c0_11 = arith.constant 0 : index
      %c0_12 = arith.constant 0 : index
      %19 = vector.load %arg9[%c0_11, %c0_12] : memref<1x128xf32, #tpu.memory_space<vmem>>, vector<1x128xf32>
      %20 = vector.broadcast %19 : vector<1x128xf32> to vector<32x128xf32>
      %21 = arith.mulf %7, %20 : vector<32x128xf32>
      %c0_13 = arith.constant 0 : index
      %c0_14 = arith.constant 0 : index
      %22 = vector.load %arg10[%c0_13, %c0_14] : memref<1x128xf32, #tpu.memory_space<vmem>>, vector<1x128xf32>
      %23 = vector.broadcast %22 : vector<1x128xf32> to vector<32x128xf32>
      %24 = arith.addf %21, %23 : vector<32x128xf32>
      %cst_15 = arith.constant 0.000000e+00 : f32
      %25 = vector.broadcast %cst_15 : f32 to vector<32x128xf32>
      %26 = arith.maximumf %24, %25 : vector<32x128xf32>
      %c0_16 = arith.constant 0 : index
      %c0_17 = arith.constant 0 : index
      %27 = vector.load %arg6[%c0_16, %c0_17] : memref<32x128xf32, #tpu.memory_space<vmem>>, vector<32x128xf32>
      tpu.vector_store %arg6[%c0_16, %c0_17], %26 {strides = array<i32>} : memref<32x128xf32, #tpu.memory_space<vmem>>, vector<32x128xf32>,
    } else {
    }
    return
  }
  func.func @transform_0(%arg0: i32, %arg1: i32) -> (i32, i32) {
    %c0_i32 = arith.constant 0 : i32
    %c0_i32_0 = arith.constant 0 : i32
    %c0_i32_1 = arith.constant 0 : i32
    return %c0_i32, %c0_i32_0 : i32, i32
  }
  func.func @transform_1(%arg0: i32, %arg1: i32) -> (i32, i32) {
    %c0_i32 = arith.constant 0 : i32
    %c0_i32_0 = arith.constant 0 : i32
    %c0_i32_1 = arith.constant 0 : i32
    return %c0_i32, %c0_i32_0 : i32, i32
  }
  func.func @transform_2(%arg0: i32, %arg1: i32) -> (i32, i32) {
    %c0_i32 = arith.constant 0 : i32
    %c0_i32_0 = arith.constant 0 : i32
    return %arg1, %c0_i32 : i32, i32
  }
  func.func @transform_3(%arg0: i32, %arg1: i32) -> (i32, i32) {
    %c0_i32 = arith.constant 0 : i32
    %c0_i32_0 = arith.constant 0 : i32
    %c0_i32_1 = arith.constant 0 : i32
    return %c0_i32, %c0_i32_0 : i32, i32
  }
  func.func @transform_4(%arg0: i32, %arg1: i32) -> (i32, i32) {
    %0 = arith.muli %arg1, %arg0 : i32
    %c0_i32 = arith.constant 0 : i32
    %c0_i32_0 = arith.constant 0 : i32
    return %0, %c0_i32 : i32, i32
  }
}

</mosaic_0001>

<llo_original>
// kernel: _lambda_.2
$region0: #{_lambda_.2}
  #allocation0 [shape = 'u32[]', space=smem, size = 0x4, offset = 0x4, fixed_abs, tag = 'smem constant byte address 0x4 - core index']
  #allocation1 [shape = 'u32[72,128]{1,0:T(1,128)}', space=vmem, size = 0x9000, scoped, tag = 'internal scratch']
  #allocation2 [shape = 'f32[1,128]{1,0:T(1,128)}', space=vmem, size = 0x200, scoped, tag = 'scratch operand']
  #allocation3 [shape = 'f32[1,128]{1,0:T(1,128)}', space=vmem, size = 0x200, scoped, tag = 'scratch operand']
  #allocation4 [shape = 'f32[1,128]{1,0:T(1,128)}', space=vmem, size = 0x200, scoped, tag = 'scratch operand']
  #allocation5 [shape = 'f32[1,128]{1,0:T(1,128)}', space=vmem, size = 0x200, scoped, tag = 'scratch operand']
  %s0 = inlined_call_operand.vmem [shape: f32[1,128], index: 0, kind: input, shape index: {}]
  %s1 = inlined_call_operand.vmem [shape: f32[1,128], index: 1, kind: input, shape index: {}]
  %s2 = inlined_call_operand.vmem [shape: bf16[112,16], index: 2, kind: input, shape index: {}]
  %s3 = inlined_call_operand.vmem [shape: bf16[16,128], index: 3, kind: input, shape index: {}]
  %s4 = inlined_call_operand.vmem [shape: f32[112,128], index: 4, kind: output, shape index: {}]
  %s5 = sld [smem:[#allocation0]]
  $region65: #{_lambda_.2} parent=0
    _
  %s7 = ssub.s32 1, %s5
  %s8 = scalar_select 0, %s7, %s5
  loop: start=0, step=1, limit=4
  $region2: #{_lambda_.2} parent=0 // loop_pre_header
    _
  $region3: #{_lambda_.2} parent=0 // loop_header
    %s10 = sphi 0, %s14
    %p11 = scmp.ge.s32.totalorder %s10, 4
    %s17 = sphi 0, %s29
    %s18 = sphi 0, %s25
    %s19 = sphi 0, %s17
    %s20 = sphi 0, %s18
    %s21 = sphi 0, %s19
    %s22 = sphi 0, %s20
    %s30 = sphi 0, %s30
    %s32 = sphi 0, %s30
    %s33 = sphi 0, %s32
    %s47 = sphi 0, %s33
    %s51 = sphi 0, %s51
    %s53 = sphi 0, %s51
    %s54 = sphi 0, %s53
    %s68 = sphi 0, %s54
    %s74 = sphi 0, %s76
    %s77 = sphi 0, %s74
    %s78 = sphi 0, %s77
    %s94 = sphi 0, %s78
    %s98 = sphi 0, %s98
    %s100 = sphi 0, %s98
    %s101 = sphi 0, %s100
    %s115 = sphi 0, %s101
    %s123 = sphi 0, %s125
    %s126 = sphi 0, %s123
    %s127 = sphi 0, %s126
    %s143 = sphi 0, %s127
  $region4: #{_lambda_.2} parent=0 // loop_header_branch
    %13 = sbr.rel (%p11) target = $region8
  $region5: #{_lambda_.2} parent=0 // loop_body
    %s15 = ssub.s32 %s10, 1
    %s16 = ssub.s32 %s10, 2
    %s23 = sadd.s32 1, %s18
    %p24 = scmp.ge.s32.totalorder %s23, 1
    %s25 = scalar_select %p24, 0, %s23
    %s26 = sadd.s32 1, %s17
    %s27 = scalar_select %p24, %s26, %s17
    %p28 = scmp.ge.s32.totalorder %s27, 2
    %s29 = scalar_select %p28, 0, %s27
    %s31 = sadd.s32 %s30, 1
    %p34 = scmp.eq.s32.totalorder %s10, 1
    %p35 = scmp.ne.s32.totalorder %s30, %s32
    %p36 = scmp.eq.s32.totalorder %s10, 0
    %p37 = por %p35, %p36
    %p38 = scmp.ne.s32.totalorder %s30, %s32
    %p39 = scmp.eq.s32.totalorder %s15, 1
    %p40 = por %p38, %p39
    %p41 = scmp.ne.s32.totalorder %s32, %s33
    %p42 = scmp.eq.s32.totalorder %s15, 0
    %p43 = por %p41, %p42
    %p44 = scmp.ne.s32.totalorder %s32, %s33
    %p45 = scmp.eq.s32.totalorder %s16, 1
    %p46 = por %p44, %p45
    %p48 = scmp.ne.s32.totalorder %s33, %s47
    %p49 = scmp.eq.s32.totalorder %s16, 0
    %p50 = por %p48, %p49
    %s52 = sadd.s32 %s51, 1
    %p55 = scmp.eq.s32.totalorder %s10, 1
    %p56 = scmp.ne.s32.totalorder %s51, %s53
    %p57 = scmp.eq.s32.totalorder %s10, 0
    %p58 = por %p56, %p57
    %p59 = scmp.ne.s32.totalorder %s51, %s53
    %p60 = scmp.eq.s32.totalorder %s15, 1
    %p61 = por %p59, %p60
    %p62 = scmp.ne.s32.totalorder %s53, %s54
    %p63 = scmp.eq.s32.totalorder %s15, 0
    %p64 = por %p62, %p63
    %p65 = scmp.ne.s32.totalorder %s53, %s54
    %p66 = scmp.eq.s32.totalorder %s16, 1
    %p67 = por %p65, %p66
    %p69 = scmp.ne.s32.totalorder %s54, %s68
    %p70 = scmp.eq.s32.totalorder %s16, 0
    %p71 = por %p69, %p70
    %s72 = ssub.s32 %s18, %s25
    %p73 = scmp.eq.s32.totalorder %s72, 0
    %s75 = sadd.s32 %s74, 1
    %s76 = scalar_select %p73, %s74, %s75
    %p79 = pneg %p73
    %p80 = scmp.eq.s32.totalorder %s10, 1
    %p81 = por %p79, %p80
    %p82 = scmp.ne.s32.totalorder %s74, %s77
    %p83 = scmp.eq.s32.totalorder %s10, 0
    %p84 = por %p82, %p83
    %p85 = scmp.ne.s32.totalorder %s74, %s77
    %p86 = scmp.eq.s32.totalorder %s15, 1
    %p87 = por %p85, %p86
    %p88 = scmp.ne.s32.totalorder %s77, %s78
    %p89 = scmp.eq.s32.totalorder %s15, 0
    %p90 = por %p88, %p89
    %p91 = scmp.ne.s32.totalorder %s77, %s78
    %p92 = scmp.eq.s32.totalorder %s16, 1
    %p93 = por %p91, %p92
    %p95 = scmp.ne.s32.totalorder %s78, %s94
    %p96 = scmp.eq.s32.totalorder %s16, 0
    %p97 = por %p95, %p96
    %s99 = sadd.s32 %s98, 1
    %p102 = scmp.eq.s32.totalorder %s10, 1
    %p103 = scmp.ne.s32.totalorder %s98, %s100
    %p104 = scmp.eq.s32.totalorder %s10, 0
    %p105 = por %p103, %p104
    %p106 = scmp.ne.s32.totalorder %s98, %s100
    %p107 = scmp.eq.s32.totalorder %s15, 1
    %p108 = por %p106, %p107
    %p109 = scmp.ne.s32.totalorder %s100, %s101
    %p110 = scmp.eq.s32.totalorder %s15, 0
    %p111 = por %p109, %p110
    %p112 = scmp.ne.s32.totalorder %s100, %s101
    %p113 = scmp.eq.s32.totalorder %s16, 1
    %p114 = por %p112, %p113
    %p116 = scmp.ne.s32.totalorder %s101, %s115
    %p117 = scmp.eq.s32.totalorder %s16, 0
    %p118 = por %p116, %p117
    %s119 = smul.u32 %s18, %s17
    %s120 = smul.u32 %s25, %s29
    %s121 = ssub.s32 %s119, %s120
    %p122 = scmp.eq.s32.totalorder %s121, 0
    %s124 = sadd.s32 %s123, 1
    %s125 = scalar_select %p122, %s123, %s124
    %p128 = pneg %p122
    %p129 = scmp.eq.s32.totalorder %s10, 1
    %p130 = por %p128, %p129
    %p131 = scmp.ne.s32.totalorder %s123, %s126
    %p132 = scmp.eq.s32.totalorder %s10, 0
    %p133 = por %p131, %p132
    %p134 = scmp.ne.s32.totalorder %s123, %s126
    %p135 = scmp.eq.s32.totalorder %s15, 1
    %p136 = por %p134, %p135
    %p137 = scmp.ne.s32.totalorder %s126, %s127
    %p138 = scmp.eq.s32.totalorder %s15, 0
    %p139 = por %p137, %p138
    %p140 = scmp.ne.s32.totalorder %s126, %s127
    %p141 = scmp.eq.s32.totalorder %s16, 1
    %p142 = por %p140, %p141
    %p144 = scmp.ne.s32.totalorder %s127, %s143
    %p145 = scmp.eq.s32.totalorder %s16, 0
    %p146 = por %p144, %p145
    %p147 = scmp.le.s32.totalorder 1, %s10
    %p148 = scmp.lt.s32.totalorder %s10, 3
    %p149 = pnand %p147, %p148
    %p150 = pneg %p149
    // Predicated region
    $region9: #{_lambda_.2} parent=5 // pred_check
      _
    $region10: #{_lambda_.2} parent=5 // pred_check_branch
      %152 = sbr.rel (%p149) target = $region12
    $region11: #{_lambda_.2} parent=5 // pred_region
      %s153 = ssub.s32 %s10, 1
      // Predicated region
      $region13: #{_lambda_.2} parent=11 // pred_check
        %p154 = pneg %p43
      $region14: #{_lambda_.2} parent=11 // pred_check_branch
        %156 = sbr.rel (%p154) target = $region16
      $region15: #{_lambda_.2} parent=11 // pred_region
        _
      $region16: #{_lambda_.2} parent=11 // pred_fallthru
        _
      // Predicated region
      $region17: #{_lambda_.2} parent=11 // pred_check
        %p157 = pneg %p64
      $region18: #{_lambda_.2} parent=11 // pred_check_branch
        %159 = sbr.rel (%p157) target = $region20
      $region19: #{_lambda_.2} parent=11 // pred_region
        _
      $region20: #{_lambda_.2} parent=11 // pred_fallthru
        _
      // Predicated region
      $region21: #{_lambda_.2} parent=11 // pred_check
        %p160 = pneg %p90
      $region22: #{_lambda_.2} parent=11 // pred_check_branch
        %162 = sbr.rel (%p160) target = $region24
      $region23: #{_lambda_.2} parent=11 // pred_region
        %s163 = smul.u32 14, %s20
        %p164 = scmp.lt.s32.totalorder %s163, 13
        %s165 = scalar_select %p164, %s163, 13
        %s166 = smul.addr %s165, 4
        %s167 = scalar_lea.vmem %s2, %s166
        %s168 = smul.u32 14, %s20
      $region24: #{_lambda_.2} parent=11 // pred_fallthru
        _
      // Predicated region
      $region25: #{_lambda_.2} parent=11 // pred_check
        %p169 = pneg %p111
      $region26: #{_lambda_.2} parent=11 // pred_check_branch
        %171 = sbr.rel (%p169) target = $region28
      $region27: #{_lambda_.2} parent=11 // pred_region
        _
      $region28: #{_lambda_.2} parent=11 // pred_fallthru
        _
    $region12: #{_lambda_.2} parent=5 // pred_fallthru
      _
    %p172 = scmp.lt.s32.totalorder %s10, 2
    // Predicated region
    $region29: #{_lambda_.2} parent=5 // pred_check
      %p173 = pneg %p172
    $region30: #{_lambda_.2} parent=5 // pred_check_branch
      %175 = sbr.rel (%p173) target = $region32
    $region31: #{_lambda_.2} parent=5 // pred_region
      _
    $region32: #{_lambda_.2} parent=5 // pred_fallthru
      _
    %p176 = scmp.le.s32.totalorder 1, %s10
    %p177 = scmp.lt.s32.totalorder %s10, 3
    %p178 = pnand %p176, %p177
    %p179 = pneg %p178
    // Predicated region
    $region33: #{_lambda_.2} parent=5 // pred_check
      _
    $region34: #{_lambda_.2} parent=5 // pred_check_branch
      %181 = sbr.rel (%p178) target = $region36
    $region35: #{_lambda_.2} parent=5 // pred_region
      %s182 = ssub.s32 %s10, 1
      %p183 = pneg %p43
      %p184 = pneg %p40
      %p185 = pneg %p64
      %p186 = pneg %p61
      %s187 = smul.u32 14, %s20
      %p188 = scmp.lt.s32.totalorder %s187, 13
      %s189 = scalar_select %p188, %s187, 13
      %s190 = smul.addr %s189, 4
      %s191 = scalar_lea.vmem %s2, %s190
      %p192 = pneg %p90
      %p193 = pneg %p87
      %p194 = pneg %p111
      %p195 = pneg %p108
      %p196 = pneg %p139
      %p197 = pneg %p136
      %s198 = smul.u32 %s20, %s19
      %s199 = smul.u32 14, %s198
      %p200 = scmp.lt.s32.totalorder %s199, 13
      %s201 = scalar_select %p200, %s199, 13
      %s202 = smul.addr %s201, 8
      %s203 = scalar_lea.vmem %s4, %s202
      %s204 = smul.u32 14, %s20
      %p205 = scmp.lt.s32.totalorder %s204, 13
      %s206 = scalar_select %p205, %s204, 13
      %s207 = smul.addr %s206, 4
      %s208 = scalar_lea.vmem %s2, %s207
      %s209 = smul.u32 14, %s20
      %s210 = smul.u32 %s20, %s19
      %s211 = smul.u32 14, %s210
      %p212 = scmp.lt.s32.totalorder %s211, 13
      %s213 = scalar_select %p212, %s211, 13
      %s214 = smul.addr %s213, 8
      %s215 = scalar_lea.vmem %s4, %s214
      %s216 = smul.u32 %s20, %s19
      %s217 = smul.u32 14, %s216
      %p219 = scmp.eq.s32.totalorder %s19, 0
      %p220 = scmp.eq.s32.totalorder %s20, 0
      %p221 = pnand %p219, %p220
      %p222 = pneg %p221
      // Predicated region
      $region37: #{_lambda_.2} parent=35 // pred_check
        _
      $region38: #{_lambda_.2} parent=35 // pred_check_branch
        %224 = sbr.rel (%p221) target = $region40
      $region39: #{_lambda_.2} parent=35 // pred_region
        %225 = vst [vmem:[#allocation2] sm:$0x1] 0.0
        %226 = vst [vmem:[#allocation3] sm:$0x1] 0.0
      $region40: #{_lambda_.2} parent=35 // pred_fallthru
        _
      %v227 = vld [vmem:[%s208] sm:$0xf]
      %v228 = vld [vmem:[%s208 + $0x4] sm:$0xf]
      %v229 = vld [vmem:[%s208 + $0x8] sm:$0xf]
      %v230 = vld [vmem:[%s208 + $0xc] sm:$0xf]
      %v231 = vld [vmem:[%s208 + $0x10] sm:$0xf]
      %v232 = vld [vmem:[%s208 + $0x14] sm:$0xf]
      %v233 = vld [vmem:[%s208 + $0x18] sm:$0xf]
      %v234 = vld [vmem:[%s208 + $0x1c] sm:$0xf]
      %v235 = vld [vmem:[%s208 + $0x20] sm:$0xf]
      %v236 = vld [vmem:[%s208 + $0x24] sm:$0xf]
      %v237 = vld [vmem:[%s208 + $0x28] sm:$0xf]
      %v238 = vld [vmem:[%s208 + $0x2c] sm:$0xf]
      %v239 = vld [vmem:[%s208 + $0x30] sm:$0xf]
      %v240 = vld [vmem:[%s208 + $0x34] sm:$0xf]
      %v241 = vld [vmem:[%s3] sm:$0xf]
      %v242 = vld [vmem:[%s3 + $0x4] sm:$0xf]
      %v257 = vunpack.c.l.b16 %v227
      %v258 = vunpack.c.l.b16 %v228
      %v259 = vunpack.c.l.b16 %v229
      %v260 = vunpack.c.l.b16 %v230
      %v261 = vunpack.c.l.b16 %v231
      %v262 = vunpack.c.l.b16 %v232
      %v263 = vunpack.c.l.b16 %v233
      %v264 = vunpack.c.l.b16 %v234
      %v265 = vunpack.c.l.b16 %v235
      %v266 = vunpack.c.l.b16 %v236
      %v267 = vunpack.c.l.b16 %v237
      %v268 = vunpack.c.l.b16 %v238
      %v269 = vunpack.c.l.b16 %v239
      %v270 = vunpack.c.l.b16 %v240
      %v271 = vpack.c.b16 %v258, %v257
      %v272 = vpack.c.b16 %v260, %v259
      %v273 = vpack.c.b16 %v262, %v261
      %v274 = vpack.c.b16 %v264, %v263
      %v275 = vpack.c.b16 %v266, %v265
      %v276 = vpack.c.b16 %v268, %v267
      %v277 = vpack.c.b16 %v270, %v269
      %v280 = vunpack.c.l.b16 %v241
      %v281 = vunpack.c.l.b16 %v242
      %v282 = vpack.c.b16 %v281, %v280
      %vm284 = vcmask 130048
      %v286 = vsel %vm284, %v271, 0
      %v289 = vsel %vm284, %v272, 0
      %v292 = vsel %vm284, %v273, 0
      %v295 = vsel %vm284, %v274, 0
      %v298 = vsel %vm284, %v275, 0
      %v301 = vsel %vm284, %v276, 0
      %v304 = vsel %vm284, %v277, 0
      %306 = vmatpush.bf16.msra.mxu0 0
      %307 = vmatpush.bf16.msra.mxu0 0
      %308 = vmatpush.bf16.msra.mxu0 0
      %309 = vmatpush.bf16.msra.mxu0 0
      %310 = vmatpush.bf16.msra.mxu0 0
      %311 = vmatpush.bf16.msra.mxu0 0
      %312 = vmatpush.bf16.msra.mxu0 0
      %313 = vmatpush.bf16.msra.mxu0 %v282
      %314 = vmatmul.bf16.gmra.mxu0 %v286
      %v315 = vpop.f32.mrf.mxu0
      %v316 = vadd.f32 0.0, %v315
      %v317 = vpop.f32.mrf.mxu0
      %v318 = vadd.f32 0.0, %v317
      %319 = vmatmul.bf16.gmra.mxu0 %v289
      %v320 = vpop.f32.mrf.mxu0
      %v321 = vadd.f32 0.0, %v320
      %v322 = vpop.f32.mrf.mxu0
      %v323 = vadd.f32 0.0, %v322
      %324 = vmatmul.bf16.gmra.mxu0 %v292
      %v325 = vpop.f32.mrf.mxu0
      %v326 = vadd.f32 0.0, %v325
      %v327 = vpop.f32.mrf.mxu0
      %v328 = vadd.f32 0.0, %v327
      %329 = vmatmul.bf16.gmra.mxu0 %v295
      %v330 = vpop.f32.mrf.mxu0
      %v331 = vadd.f32 0.0, %v330
      %v332 = vpop.f32.mrf.mxu0
      %v333 = vadd.f32 0.0, %v332
      %334 = vmatmul.bf16.gmra.mxu0 %v298
      %v335 = vpop.f32.mrf.mxu0
      %v336 = vadd.f32 0.0, %v335
      %v337 = vpop.f32.mrf.mxu0
      %v338 = vadd.f32 0.0, %v337
      %339 = vmatmul.bf16.gmra.mxu0 %v301
      %v340 = vpop.f32.mrf.mxu0
      %v341 = vadd.f32 0.0, %v340
      %v342 = vpop.f32.mrf.mxu0
      %v343 = vadd.f32 0.0, %v342
      %344 = vmatmul.bf16.gmra.mxu0 %v304
      %v345 = vpop.f32.mrf.mxu0
      %v346 = vadd.f32 0.0, %v345
      %v347 = vpop.f32.mrf.mxu0
      %v348 = vadd.f32 0.0, %v347
      %349 = vdwg.mxu0
      // Predicated region
      $region41: #{_lambda_.2} parent=35 // pred_check
        %p350 = pneg %p219
      $region42: #{_lambda_.2} parent=35 // pred_check_branch
        %352 = sbr.rel (%p350) target = $region44
      $region43: #{_lambda_.2} parent=35 // pred_region
        %v353 = vld [vmem:[#allocation2] sm:$0x1]
        %v354 = vadd.f32 %v316, %v318
        %v355 = vadd.f32 %v354, %v321
        %v356 = vadd.f32 %v355, %v323
        %v357 = vadd.f32 %v356, %v326
        %v358 = vadd.f32 %v357, %v328
        %v359 = vadd.f32 %v358, %v331
        %v360 = vadd.f32 %v359, %v333
        %v361 = vadd.f32 %v360, %v336
        %v362 = vadd.f32 %v361, %v338
        %v363 = vadd.f32 %v362, %v341
        %v364 = vadd.f32 %v363, %v343
        %v365 = vadd.f32 %v364, %v346
        %v366 = vadd.f32 %v365, %v348
        %v367 = vrot.slane %v366, 4
        %v368 = vadd.f32 %v366, %v367
        %v369 = vrot.slane %v368, 2
        %v370 = vadd.f32 %v368, %v369
        %v371 = vrot.slane %v370, 1
        %v372 = vadd.f32 %v370, %v371
        %v373 = vadd.f32 %v353, %v372
        %374 = vst [vmem:[#allocation2] sm:$0x1] %v373
        %v375 = vld [vmem:[#allocation3] sm:$0x1]
        %v376 = vmul.f32 %v316, %v316
        %v377 = vmul.f32 %v318, %v318
        %v378 = vmul.f32 %v321, %v321
        %v379 = vmul.f32 %v323, %v323
        %v380 = vmul.f32 %v326, %v326
        %v381 = vmul.f32 %v328, %v328
        %v382 = vmul.f32 %v331, %v331
        %v383 = vmul.f32 %v333, %v333
        %v384 = vmul.f32 %v336, %v336
        %v385 = vmul.f32 %v338, %v338
        %v386 = vmul.f32 %v341, %v341
        %v387 = vmul.f32 %v343, %v343
        %v388 = vmul.f32 %v346, %v346
        %v389 = vmul.f32 %v348, %v348
        %v390 = vadd.f32 %v376, %v377
        %v391 = vadd.f32 %v390, %v378
        %v392 = vadd.f32 %v391, %v379
        %v393 = vadd.f32 %v392, %v380
        %v394 = vadd.f32 %v393, %v381
        %v395 = vadd.f32 %v394, %v382
        %v396 = vadd.f32 %v395, %v383
        %v397 = vadd.f32 %v396, %v384
        %v398 = vadd.f32 %v397, %v385
        %v399 = vadd.f32 %v398, %v386
        %v400 = vadd.f32 %v399, %v387
        %v401 = vadd.f32 %v400, %v388
        %v402 = vadd.f32 %v401, %v389
        %v403 = vrot.slane %v402, 4
        %v404 = vadd.f32 %v402, %v403
        %v405 = vrot.slane %v404, 2
        %v406 = vadd.f32 %v404, %v405
        %v407 = vrot.slane %v406, 1
        %v408 = vadd.f32 %v406, %v407
        %v409 = vadd.f32 %v375, %v408
        %410 = vst [vmem:[#allocation3] sm:$0x1] %v409
      $region44: #{_lambda_.2} parent=35 // pred_fallthru
        _
      // Predicated region
      $region45: #{_lambda_.2} parent=35 // pred_check
        _
      $region46: #{_lambda_.2} parent=35 // pred_check_branch
        %412 = sbr.rel (%p221) target = $region48
      $region47: #{_lambda_.2} parent=35 // pred_region
        %v413 = vld [vmem:[#allocation2] sm:$0x1]
        %v414 = vmul.f32 %v413, 0.010204081
        %v415 = vld [vmem:[#allocation3] sm:$0x1]
        %v416 = vmul.f32 %v415, 0.010204081
        %v417 = vmul.f32 %v414, %v414
        %v418 = vsub.f32 %v416, %v417
        %v419 = vmax.f32 %v418, 0.0
        %v420 = vadd.f32 %v419, 1e-05
        %v421 = vrsqrt.pop %v420
        %v422 = vmul.f32 %v421, %v420
        %v423 = vmul.f32 %v422, %v421
        %v424 = vmul.f32 0.5, %v423
        %v425 = vsub.f32 1.5, %v424
        %v426 = vmul.f32 %v421, %v425
        %vm427 = vweird.f32 %v420
        %vm428 = vweird.f32 %v421
        %vm429 = vmor %vm427, %vm428
        %v430 = vsel %vm429, %v421, %v426
        %v431 = vld [vmem:[%s0] sm:$0x1]
        %v432 = vmul.f32 %v431, %v430
        %433 = vst [vmem:[#allocation4] sm:$0x1] %v432
        %v434 = vld [vmem:[%s1] sm:$0x1]
        %v435 = vmul.f32 %v414, %v432
        %v436 = vsub.f32 %v434, %v435
        %437 = vst [vmem:[#allocation5] sm:$0x1] %v436
      $region48: #{_lambda_.2} parent=35 // pred_fallthru
        _
      %p438 = scmp.eq.s32.totalorder %s19, 1
      // Predicated region
      $region49: #{_lambda_.2} parent=35 // pred_check
        %p439 = pneg %p438
      $region50: #{_lambda_.2} parent=35 // pred_check_branch
        %441 = sbr.rel (%p439) target = $region52
      $region51: #{_lambda_.2} parent=35 // pred_region
        %v442 = vld [vmem:[#allocation4] sm:$0x1]
        %v444 = vperm.slane %v442, 0
        %v446 = vmul.f32 %v316, %v444
        %v447 = vmul.f32 %v318, %v444
        %v448 = vmul.f32 %v321, %v444
        %v449 = vmul.f32 %v323, %v444
        %v450 = vmul.f32 %v326, %v444
        %v451 = vmul.f32 %v328, %v444
        %v452 = vmul.f32 %v331, %v444
        %v453 = vmul.f32 %v333, %v444
        %v454 = vmul.f32 %v336, %v444
        %v455 = vmul.f32 %v338, %v444
        %v456 = vmul.f32 %v341, %v444
        %v457 = vmul.f32 %v343, %v444
        %v458 = vmul.f32 %v346, %v444
        %v459 = vmul.f32 %v348, %v444
        %v460 = vld [vmem:[#allocation5] sm:$0x1]
        %v462 = vperm.slane %v460, 0
        %v464 = vadd.f32 %v446, %v462
        %v465 = vadd.f32 %v447, %v462
        %v466 = vadd.f32 %v448, %v462
        %v467 = vadd.f32 %v449, %v462
        %v468 = vadd.f32 %v450, %v462
        %v469 = vadd.f32 %v451, %v462
        %v470 = vadd.f32 %v452, %v462
        %v471 = vadd.f32 %v453, %v462
        %v472 = vadd.f32 %v454, %v462
        %v473 = vadd.f32 %v455, %v462
        %v474 = vadd.f32 %v456, %v462
        %v475 = vadd.f32 %v457, %v462
        %v476 = vadd.f32 %v458, %v462
        %v477 = vadd.f32 %v459, %v462
        %v478 = vmax.f32 %v464, 0.0
        %v479 = vmax.f32 %v465, 0.0
        %v480 = vmax.f32 %v466, 0.0
        %v481 = vmax.f32 %v467, 0.0
        %v482 = vmax.f32 %v468, 0.0
        %v483 = vmax.f32 %v469, 0.0
        %v484 = vmax.f32 %v470, 0.0
        %v485 = vmax.f32 %v471, 0.0
        %v486 = vmax.f32 %v472, 0.0
        %v487 = vmax.f32 %v473, 0.0
        %v488 = vmax.f32 %v474, 0.0
        %v489 = vmax.f32 %v475, 0.0
        %v490 = vmax.f32 %v476, 0.0
        %v491 = vmax.f32 %v477, 0.0
        %492 = vst [vmem:[%s215] sm:$0xff] %v478
        %493 = vst [vmem:[%s215 + $0x8] sm:$0xff] %v479
        %494 = vst [vmem:[%s215 + $0x10] sm:$0xff] %v480
        %495 = vst [vmem:[%s215 + $0x18] sm:$0xff] %v481
        %496 = vst [vmem:[%s215 + $0x20] sm:$0xff] %v482
        %497 = vst [vmem:[%s215 + $0x28] sm:$0xff] %v483
        %498 = vst [vmem:[%s215 + $0x30] sm:$0xff] %v484
        %499 = vst [vmem:[%s215 + $0x38] sm:$0xff] %v485
        %500 = vst [vmem:[%s215 + $0x40] sm:$0xff] %v486
        %501 = vst [vmem:[%s215 + $0x48] sm:$0xff] %v487
        %502 = vst [vmem:[%s215 + $0x50] sm:$0xff] %v488
        %503 = vst [vmem:[%s215 + $0x58] sm:$0xff] %v489
        %504 = vst [vmem:[%s215 + $0x60] sm:$0xff] %v490
        %505 = vst [vmem:[%s215 + $0x68] sm:$0xff] %v491
      $region52: #{_lambda_.2} parent=35 // pred_fallthru
        _
      %s506 = smul.u32 %s20, %s19
      %s507 = smul.u32 14, %s506
      %p508 = scmp.lt.s32.totalorder %s507, 13
      %s509 = scalar_select %p508, %s507, 13
      %s510 = smul.addr %s509, 8
      %s511 = scalar_lea.vmem %s4, %s510
      // Predicated region
      $region53: #{_lambda_.2} parent=35 // pred_check
        %p512 = pneg %p136
      $region54: #{_lambda_.2} parent=35 // pred_check_branch
        %514 = sbr.rel (%p512) target = $region56
      $region55: #{_lambda_.2} parent=35 // pred_region
        %s515 = smul.u32 %s20, %s19
        %s516 = smul.u32 14, %s515
      $region56: #{_lambda_.2} parent=35 // pred_fallthru
        _
    $region36: #{_lambda_.2} parent=5 // pred_fallthru
      _
    %p517 = scmp.le.s32.totalorder 2, %s10
    // Predicated region
    $region57: #{_lambda_.2} parent=5 // pred_check
      %p518 = pneg %p517
    $region58: #{_lambda_.2} parent=5 // pred_check_branch
      %520 = sbr.rel (%p518) target = $region60
    $region59: #{_lambda_.2} parent=5 // pred_region
      %s521 = ssub.s32 %s10, 2
      // Predicated region
      $region61: #{_lambda_.2} parent=59 // pred_check
        %p522 = pneg %p142
      $region62: #{_lambda_.2} parent=59 // pred_check_branch
        %524 = sbr.rel (%p522) target = $region64
      $region63: #{_lambda_.2} parent=59 // pred_region
        %s525 = smul.u32 %s22, %s21
        %s526 = smul.u32 14, %s525
        %p527 = scmp.lt.s32.totalorder %s526, 13
        %s528 = scalar_select %p527, %s526, 13
        %s529 = smul.addr %s528, 8
        %s530 = scalar_lea.vmem %s4, %s529
      $region64: #{_lambda_.2} parent=59 // pred_fallthru
        _
    $region60: #{_lambda_.2} parent=5 // pred_fallthru
      _
  $region6: #{_lambda_.2} parent=0 // loop_footer
    %s14 = sadd.s32 1, %s10
  $region7: #{_lambda_.2} parent=0 // loop_footer_branch
    %9 = sbr.rel target = $region3
  $region8: #{_lambda_.2} parent=0 // loop_exit
    _

// kernel: _lambda_.3
$region0: #{_lambda_.3}
  #allocation0 [shape = 'u32[]', space=smem, size = 0x4, offset = 0x4, fixed_abs, tag = 'smem constant byte address 0x4 - core index']
  #allocation1 [shape = 'u32[72,128]{1,0:T(1,128)}', space=vmem, size = 0x9000, scoped, tag = 'internal scratch']
  #allocation2 [shape = 'f32[1,128]{1,0:T(1,128)}', space=vmem, size = 0x200, scoped, tag = 'scratch operand']
  #allocation3 [shape = 'f32[1,128]{1,0:T(1,128)}', space=vmem, size = 0x200, scoped, tag = 'scratch operand']
  #allocation4 [shape = 'f32[1,128]{1,0:T(1,128)}', space=vmem, size = 0x200, scoped, tag = 'scratch operand']
  #allocation5 [shape = 'f32[1,128]{1,0:T(1,128)}', space=vmem, size = 0x200, scoped, tag = 'scratch operand']
  %s0 = inlined_call_operand.vmem [shape: f32[1,128], index: 0, kind: input, shape index: {}]
  %s1 = inlined_call_operand.vmem [shape: f32[1,128], index: 1, kind: input, shape index: {}]
  %s2 = inlined_call_operand.vmem [shape: bf16[32,48], index: 2, kind: input, shape index: {}]
  %s3 = inlined_call_operand.vmem [shape: bf16[48,128], index: 3, kind: input, shape index: {}]
  %s4 = inlined_call_operand.vmem [shape: f32[32,128], index: 4, kind: output, shape index: {}]
  %s5 = sld [smem:[#allocation0]]
  $region65: #{_lambda_.3} parent=0
    _
  %s7 = ssub.s32 1, %s5
  %s8 = scalar_select 0, %s7, %s5
  loop: start=0, step=1, limit=4
  $region2: #{_lambda_.3} parent=0 // loop_pre_header
    _
  $region3: #{_lambda_.3} parent=0 // loop_header
    %s10 = sphi 0, %s14
    %p11 = scmp.ge.s32.totalorder %s10, 4
    %s17 = sphi 0, %s29
    %s18 = sphi 0, %s25
    %s19 = sphi 0, %s17
    %s20 = sphi 0, %s18
    %s21 = sphi 0, %s19
    %s22 = sphi 0, %s20
    %s30 = sphi 0, %s30
    %s32 = sphi 0, %s30
    %s33 = sphi 0, %s32
    %s47 = sphi 0, %s33
    %s51 = sphi 0, %s51
    %s53 = sphi 0, %s51
    %s54 = sphi 0, %s53
    %s68 = sphi 0, %s54
    %s74 = sphi 0, %s76
    %s77 = sphi 0, %s74
    %s78 = sphi 0, %s77
    %s94 = sphi 0, %s78
    %s98 = sphi 0, %s98
    %s100 = sphi 0, %s98
    %s101 = sphi 0, %s100
    %s115 = sphi 0, %s101
    %s123 = sphi 0, %s125
    %s126 = sphi 0, %s123
    %s127 = sphi 0, %s126
    %s143 = sphi 0, %s127
  $region4: #{_lambda_.3} parent=0 // loop_header_branch
    %13 = sbr.rel (%p11) target = $region8
  $region5: #{_lambda_.3} parent=0 // loop_body
    %s15 = ssub.s32 %s10, 1
    %s16 = ssub.s32 %s10, 2
    %s23 = sadd.s32 1, %s18
    %p24 = scmp.ge.s32.totalorder %s23, 1
    %s25 = scalar_select %p24, 0, %s23
    %s26 = sadd.s32 1, %s17
    %s27 = scalar_select %p24, %s26, %s17
    %p28 = scmp.ge.s32.totalorder %s27, 2
    %s29 = scalar_select %p28, 0, %s27
    %s31 = sadd.s32 %s30, 1
    %p34 = scmp.eq.s32.totalorder %s10, 1
    %p35 = scmp.ne.s32.totalorder %s30, %s32
    %p36 = scmp.eq.s32.totalorder %s10, 0
    %p37 = por %p35, %p36
    %p38 = scmp.ne.s32.totalorder %s30, %s32
    %p39 = scmp.eq.s32.totalorder %s15, 1
    %p40 = por %p38, %p39
    %p41 = scmp.ne.s32.totalorder %s32, %s33
    %p42 = scmp.eq.s32.totalorder %s15, 0
    %p43 = por %p41, %p42
    %p44 = scmp.ne.s32.totalorder %s32, %s33
    %p45 = scmp.eq.s32.totalorder %s16, 1
    %p46 = por %p44, %p45
    %p48 = scmp.ne.s32.totalorder %s33, %s47
    %p49 = scmp.eq.s32.totalorder %s16, 0
    %p50 = por %p48, %p49
    %s52 = sadd.s32 %s51, 1
    %p55 = scmp.eq.s32.totalorder %s10, 1
    %p56 = scmp.ne.s32.totalorder %s51, %s53
    %p57 = scmp.eq.s32.totalorder %s10, 0
    %p58 = por %p56, %p57
    %p59 = scmp.ne.s32.totalorder %s51, %s53
    %p60 = scmp.eq.s32.totalorder %s15, 1
    %p61 = por %p59, %p60
    %p62 = scmp.ne.s32.totalorder %s53, %s54
    %p63 = scmp.eq.s32.totalorder %s15, 0
    %p64 = por %p62, %p63
    %p65 = scmp.ne.s32.totalorder %s53, %s54
    %p66 = scmp.eq.s32.totalorder %s16, 1
    %p67 = por %p65, %p66
    %p69 = scmp.ne.s32.totalorder %s54, %s68
    %p70 = scmp.eq.s32.totalorder %s16, 0
    %p71 = por %p69, %p70
    %s72 = ssub.s32 %s18, %s25
    %p73 = scmp.eq.s32.totalorder %s72, 0
    %s75 = sadd.s32 %s74, 1
    %s76 = scalar_select %p73, %s74, %s75
    %p79 = pneg %p73
    %p80 = scmp.eq.s32.totalorder %s10, 1
    %p81 = por %p79, %p80
    %p82 = scmp.ne.s32.totalorder %s74, %s77
    %p83 = scmp.eq.s32.totalorder %s10, 0
    %p84 = por %p82, %p83
    %p85 = scmp.ne.s32.totalorder %s74, %s77
    %p86 = scmp.eq.s32.totalorder %s15, 1
    %p87 = por %p85, %p86
    %p88 = scmp.ne.s32.totalorder %s77, %s78
    %p89 = scmp.eq.s32.totalorder %s15, 0
    %p90 = por %p88, %p89
    %p91 = scmp.ne.s32.totalorder %s77, %s78
    %p92 = scmp.eq.s32.totalorder %s16, 1
    %p93 = por %p91, %p92
    %p95 = scmp.ne.s32.totalorder %s78, %s94
    %p96 = scmp.eq.s32.totalorder %s16, 0
    %p97 = por %p95, %p96
    %s99 = sadd.s32 %s98, 1
    %p102 = scmp.eq.s32.totalorder %s10, 1
    %p103 = scmp.ne.s32.totalorder %s98, %s100
    %p104 = scmp.eq.s32.totalorder %s10, 0
    %p105 = por %p103, %p104
    %p106 = scmp.ne.s32.totalorder %s98, %s100
    %p107 = scmp.eq.s32.totalorder %s15, 1
    %p108 = por %p106, %p107
    %p109 = scmp.ne.s32.totalorder %s100, %s101
    %p110 = scmp.eq.s32.totalorder %s15, 0
    %p111 = por %p109, %p110
    %p112 = scmp.ne.s32.totalorder %s100, %s101
    %p113 = scmp.eq.s32.totalorder %s16, 1
    %p114 = por %p112, %p113
    %p116 = scmp.ne.s32.totalorder %s101, %s115
    %p117 = scmp.eq.s32.totalorder %s16, 0
    %p118 = por %p116, %p117
    %s119 = smul.u32 %s18, %s17
    %s120 = smul.u32 %s25, %s29
    %s121 = ssub.s32 %s119, %s120
    %p122 = scmp.eq.s32.totalorder %s121, 0
    %s124 = sadd.s32 %s123, 1
    %s125 = scalar_select %p122, %s123, %s124
    %p128 = pneg %p122
    %p129 = scmp.eq.s32.totalorder %s10, 1
    %p130 = por %p128, %p129
    %p131 = scmp.ne.s32.totalorder %s123, %s126
    %p132 = scmp.eq.s32.totalorder %s10, 0
    %p133 = por %p131, %p132
    %p134 = scmp.ne.s32.totalorder %s123, %s126
    %p135 = scmp.eq.s32.totalorder %s15, 1
    %p136 = por %p134, %p135
    %p137 = scmp.ne.s32.totalorder %s126, %s127
    %p138 = scmp.eq.s32.totalorder %s15, 0
    %p139 = por %p137, %p138
    %p140 = scmp.ne.s32.totalorder %s126, %s127
    %p141 = scmp.eq.s32.totalorder %s16, 1
    %p142 = por %p140, %p141
    %p144 = scmp.ne.s32.totalorder %s127, %s143
    %p145 = scmp.eq.s32.totalorder %s16, 0
    %p146 = por %p144, %p145
    %p147 = scmp.le.s32.totalorder 1, %s10
    %p148 = scmp.lt.s32.totalorder %s10, 3
    %p149 = pnand %p147, %p148
    %p150 = pneg %p149
    // Predicated region
    $region9: #{_lambda_.3} parent=5 // pred_check
      _
    $region10: #{_lambda_.3} parent=5 // pred_check_branch
      %152 = sbr.rel (%p149) target = $region12
    $region11: #{_lambda_.3} parent=5 // pred_region
      %s153 = ssub.s32 %s10, 1
      // Predicated region
      $region13: #{_lambda_.3} parent=11 // pred_check
        %p154 = pneg %p43
      $region14: #{_lambda_.3} parent=11 // pred_check_branch
        %156 = sbr.rel (%p154) target = $region16
      $region15: #{_lambda_.3} parent=11 // pred_region
        _
      $region16: #{_lambda_.3} parent=11 // pred_fallthru
        _
      // Predicated region
      $region17: #{_lambda_.3} parent=11 // pred_check
        %p157 = pneg %p64
      $region18: #{_lambda_.3} parent=11 // pred_check_branch
        %159 = sbr.rel (%p157) target = $region20
      $region19: #{_lambda_.3} parent=11 // pred_region
        _
      $region20: #{_lambda_.3} parent=11 // pred_fallthru
        _
      // Predicated region
      $region21: #{_lambda_.3} parent=11 // pred_check
        %p160 = pneg %p90
      $region22: #{_lambda_.3} parent=11 // pred_check_branch
        %162 = sbr.rel (%p160) target = $region24
      $region23: #{_lambda_.3} parent=11 // pred_region
        %s163 = smul.u32 4, %s20
        %p164 = scmp.lt.s32.totalorder %s163, 3
        %s165 = scalar_select %p164, %s163, 3
        %s166 = smul.addr %s165, 4
        %s167 = scalar_lea.vmem %s2, %s166
        %s168 = smul.u32 4, %s20
      $region24: #{_lambda_.3} parent=11 // pred_fallthru
        _
      // Predicated region
      $region25: #{_lambda_.3} parent=11 // pred_check
        %p169 = pneg %p111
      $region26: #{_lambda_.3} parent=11 // pred_check_branch
        %171 = sbr.rel (%p169) target = $region28
      $region27: #{_lambda_.3} parent=11 // pred_region
        _
      $region28: #{_lambda_.3} parent=11 // pred_fallthru
        _
    $region12: #{_lambda_.3} parent=5 // pred_fallthru
      _
    %p172 = scmp.lt.s32.totalorder %s10, 2
    // Predicated region
    $region29: #{_lambda_.3} parent=5 // pred_check
      %p173 = pneg %p172
    $region30: #{_lambda_.3} parent=5 // pred_check_branch
      %175 = sbr.rel (%p173) target = $region32
    $region31: #{_lambda_.3} parent=5 // pred_region
      _
    $region32: #{_lambda_.3} parent=5 // pred_fallthru
      _
    %p176 = scmp.le.s32.totalorder 1, %s10
    %p177 = scmp.lt.s32.totalorder %s10, 3
    %p178 = pnand %p176, %p177
    %p179 = pneg %p178
    // Predicated region
    $region33: #{_lambda_.3} parent=5 // pred_check
      _
    $region34: #{_lambda_.3} parent=5 // pred_check_branch
      %181 = sbr.rel (%p178) target = $region36
    $region35: #{_lambda_.3} parent=5 // pred_region
      %s182 = ssub.s32 %s10, 1
      %p183 = pneg %p43
      %p184 = pneg %p40
      %p185 = pneg %p64
      %p186 = pneg %p61
      %s187 = smul.u32 4, %s20
      %p188 = scmp.lt.s32.totalorder %s187, 3
      %s189 = scalar_select %p188, %s187, 3
      %s190 = smul.addr %s189, 4
      %s191 = scalar_lea.vmem %s2, %s190
      %p192 = pneg %p90
      %p193 = pneg %p87
      %p194 = pneg %p111
      %p195 = pneg %p108
      %p196 = pneg %p139
      %p197 = pneg %p136
      %s198 = smul.u32 %s20, %s19
      %s199 = smul.u32 4, %s198
      %p200 = scmp.lt.s32.totalorder %s199, 3
      %s201 = scalar_select %p200, %s199, 3
      %s202 = smul.addr %s201, 8
      %s203 = scalar_lea.vmem %s4, %s202
      %s204 = smul.u32 4, %s20
      %p205 = scmp.lt.s32.totalorder %s204, 3
      %s206 = scalar_select %p205, %s204, 3
      %s207 = smul.addr %s206, 4
      %s208 = scalar_lea.vmem %s2, %s207
      %s209 = smul.u32 4, %s20
      %s210 = smul.u32 %s20, %s19
      %s211 = smul.u32 4, %s210
      %p212 = scmp.lt.s32.totalorder %s211, 3
      %s213 = scalar_select %p212, %s211, 3
      %s214 = smul.addr %s213, 8
      %s215 = scalar_lea.vmem %s4, %s214
      %s216 = smul.u32 %s20, %s19
      %s217 = smul.u32 4, %s216
      %p219 = scmp.eq.s32.totalorder %s19, 0
      %p220 = scmp.eq.s32.totalorder %s20, 0
      %p221 = pnand %p219, %p220
      %p222 = pneg %p221
      // Predicated region
      $region37: #{_lambda_.3} parent=35 // pred_check
        _
      $region38: #{_lambda_.3} parent=35 // pred_check_branch
        %224 = sbr.rel (%p221) target = $region40
      $region39: #{_lambda_.3} parent=35 // pred_region
        %225 = vst [vmem:[#allocation2] sm:$0x1] 0.0
        %226 = vst [vmem:[#allocation3] sm:$0x1] 0.0
      $region40: #{_lambda_.3} parent=35 // pred_fallthru
        _
      %v227 = vld [vmem:[%s208] sm:$0xf]
      %v228 = vld [vmem:[%s208 + $0x4] sm:$0xf]
      %v229 = vld [vmem:[%s208 + $0x8] sm:$0xf]
      %v230 = vld [vmem:[%s208 + $0xc] sm:$0xf]
      %v231 = vld [vmem:[%s3] sm:$0xf]
      %v232 = vld [vmem:[%s3 + $0x4] sm:$0xf]
      %v233 = vld [vmem:[%s3 + $0x8] sm:$0xf]
      %v234 = vld [vmem:[%s3 + $0xc] sm:$0xf]
      %v235 = vld [vmem:[%s3 + $0x10] sm:$0xf]
      %v236 = vld [vmem:[%s3 + $0x14] sm:$0xf]
      %v241 = vunpack.c.l.b16 %v227
      %v242 = vunpack.c.l.b16 %v228
      %v243 = vunpack.c.l.b16 %v229
      %v244 = vunpack.c.l.b16 %v230
      %v245 = vpack.c.b16 %v242, %v241
      %v246 = vpack.c.b16 %v244, %v243
      %v253 = vunpack.c.l.b16 %v231
      %v254 = vunpack.c.l.b16 %v232
      %v255 = vunpack.c.l.b16 %v233
      %v256 = vunpack.c.l.b16 %v234
      %v257 = vunpack.c.l.b16 %v235
      %v258 = vunpack.c.l.b16 %v236
      %v259 = vpack.c.b16 %v254, %v253
      %v260 = vpack.c.b16 %v256, %v255
      %v261 = vpack.c.b16 %v258, %v257
      %vm265 = vcmask 392192
      %v267 = vsel %vm265, %v245, 0
      %v270 = vsel %vm265, %v246, 0
      %272 = vmatpush.bf16.msra.mxu0 0
      %273 = vmatpush.bf16.msra.mxu0 0
      %274 = vmatpush.bf16.msra.mxu0 0
      %275 = vmatpush.bf16.msra.mxu0 0
      %276 = vmatpush.bf16.msra.mxu0 0
      %277 = vmatpush.bf16.msra.mxu0 %v261
      %278 = vmatpush.bf16.msra.mxu0 %v260
      %279 = vmatpush.bf16.msra.mxu0 %v259
      %280 = vmatmul.bf16.gmra.mxu0 %v267
      %v281 = vpop.f32.mrf.mxu0
      %v282 = vadd.f32 0.0, %v281
      %v283 = vpop.f32.mrf.mxu0
      %v284 = vadd.f32 0.0, %v283
      %285 = vmatmul.bf16.gmra.mxu0 %v270
      %v286 = vpop.f32.mrf.mxu0
      %v287 = vadd.f32 0.0, %v286
      %v288 = vpop.f32.mrf.mxu0
      %v289 = vadd.f32 0.0, %v288
      %290 = vdwg.mxu0
      // Predicated region
      $region41: #{_lambda_.3} parent=35 // pred_check
        %p291 = pneg %p219
      $region42: #{_lambda_.3} parent=35 // pred_check_branch
        %293 = sbr.rel (%p291) target = $region44
      $region43: #{_lambda_.3} parent=35 // pred_region
        %v294 = vld [vmem:[#allocation2] sm:$0x1]
        %v295 = vadd.f32 %v282, %v284
        %v296 = vadd.f32 %v295, %v287
        %v297 = vadd.f32 %v296, %v289
        %v298 = vrot.slane %v297, 4
        %v299 = vadd.f32 %v297, %v298
        %v300 = vrot.slane %v299, 2
        %v301 = vadd.f32 %v299, %v300
        %v302 = vrot.slane %v301, 1
        %v303 = vadd.f32 %v301, %v302
        %v304 = vadd.f32 %v294, %v303
        %305 = vst [vmem:[#allocation2] sm:$0x1] %v304
        %v306 = vld [vmem:[#allocation3] sm:$0x1]
        %v307 = vmul.f32 %v282, %v282
        %v308 = vmul.f32 %v284, %v284
        %v309 = vmul.f32 %v287, %v287
        %v310 = vmul.f32 %v289, %v289
        %v311 = vadd.f32 %v307, %v308
        %v312 = vadd.f32 %v311, %v309
        %v313 = vadd.f32 %v312, %v310
        %v314 = vrot.slane %v313, 4
        %v315 = vadd.f32 %v313, %v314
        %v316 = vrot.slane %v315, 2
        %v317 = vadd.f32 %v315, %v316
        %v318 = vrot.slane %v317, 1
        %v319 = vadd.f32 %v317, %v318
        %v320 = vadd.f32 %v306, %v319
        %321 = vst [vmem:[#allocation3] sm:$0x1] %v320
      $region44: #{_lambda_.3} parent=35 // pred_fallthru
        _
      // Predicated region
      $region45: #{_lambda_.3} parent=35 // pred_check
        _
      $region46: #{_lambda_.3} parent=35 // pred_check_branch
        %323 = sbr.rel (%p221) target = $region48
      $region47: #{_lambda_.3} parent=35 // pred_region
        %v324 = vld [vmem:[#allocation2] sm:$0x1]
        %v325 = vmul.f32 %v324, 0.055555556
        %v326 = vld [vmem:[#allocation3] sm:$0x1]
        %v327 = vmul.f32 %v326, 0.055555556
        %v328 = vmul.f32 %v325, %v325
        %v329 = vsub.f32 %v327, %v328
        %v330 = vmax.f32 %v329, 0.0
        %v331 = vadd.f32 %v330, 1e-05
        %v332 = vrsqrt.pop %v331
        %v333 = vmul.f32 %v332, %v331
        %v334 = vmul.f32 %v333, %v332
        %v335 = vmul.f32 0.5, %v334
        %v336 = vsub.f32 1.5, %v335
        %v337 = vmul.f32 %v332, %v336
        %vm338 = vweird.f32 %v331
        %vm339 = vweird.f32 %v332
        %vm340 = vmor %vm338, %vm339
        %v341 = vsel %vm340, %v332, %v337
        %v342 = vld [vmem:[%s0] sm:$0x1]
        %v343 = vmul.f32 %v342, %v341
        %344 = vst [vmem:[#allocation4] sm:$0x1] %v343
        %v345 = vld [vmem:[%s1] sm:$0x1]
        %v346 = vmul.f32 %v325, %v343
        %v347 = vsub.f32 %v345, %v346
        %348 = vst [vmem:[#allocation5] sm:$0x1] %v347
      $region48: #{_lambda_.3} parent=35 // pred_fallthru
        _
      %p349 = scmp.eq.s32.totalorder %s19, 1
      // Predicated region
      $region49: #{_lambda_.3} parent=35 // pred_check
        %p350 = pneg %p349
      $region50: #{_lambda_.3} parent=35 // pred_check_branch
        %352 = sbr.rel (%p350) target = $region52
      $region51: #{_lambda_.3} parent=35 // pred_region
        %v353 = vld [vmem:[#allocation4] sm:$0x1]
        %v355 = vperm.slane %v353, 0
        %v357 = vmul.f32 %v282, %v355
        %v358 = vmul.f32 %v284, %v355
        %v359 = vmul.f32 %v287, %v355
        %v360 = vmul.f32 %v289, %v355
        %v361 = vld [vmem:[#allocation5] sm:$0x1]
        %v363 = vperm.slane %v361, 0
        %v365 = vadd.f32 %v357, %v363
        %v366 = vadd.f32 %v358, %v363
        %v367 = vadd.f32 %v359, %v363
        %v368 = vadd.f32 %v360, %v363
        %v369 = vmax.f32 %v365, 0.0
        %v370 = vmax.f32 %v366, 0.0
        %v371 = vmax.f32 %v367, 0.0
        %v372 = vmax.f32 %v368, 0.0
        %373 = vst [vmem:[%s215] sm:$0xff] %v369
        %374 = vst [vmem:[%s215 + $0x8] sm:$0xff] %v370
        %375 = vst [vmem:[%s215 + $0x10] sm:$0xff] %v371
        %376 = vst [vmem:[%s215 + $0x18] sm:$0xff] %v372
      $region52: #{_lambda_.3} parent=35 // pred_fallthru
        _
      %s377 = smul.u32 %s20, %s19
      %s378 = smul.u32 4, %s377
      %p379 = scmp.lt.s32.totalorder %s378, 3
      %s380 = scalar_select %p379, %s378, 3
      %s381 = smul.addr %s380, 8
      %s382 = scalar_lea.vmem %s4, %s381
      // Predicated region
      $region53: #{_lambda_.3} parent=35 // pred_check
        %p383 = pneg %p136
      $region54: #{_lambda_.3} parent=35 // pred_check_branch
        %385 = sbr.rel (%p383) target = $region56
      $region55: #{_lambda_.3} parent=35 // pred_region
        %s386 = smul.u32 %s20, %s19
        %s387 = smul.u32 4, %s386
      $region56: #{_lambda_.3} parent=35 // pred_fallthru
        _
    $region36: #{_lambda_.3} parent=5 // pred_fallthru
      _
    %p388 = scmp.le.s32.totalorder 2, %s10
    // Predicated region
    $region57: #{_lambda_.3} parent=5 // pred_check
      %p389 = pneg %p388
    $region58: #{_lambda_.3} parent=5 // pred_check_branch
      %391 = sbr.rel (%p389) target = $region60
    $region59: #{_lambda_.3} parent=5 // pred_region
      %s392 = ssub.s32 %s10, 2
      // Predicated region
      $region61: #{_lambda_.3} parent=59 // pred_check
        %p393 = pneg %p142
      $region62: #{_lambda_.3} parent=59 // pred_check_branch
        %395 = sbr.rel (%p393) target = $region64
      $region63: #{_lambda_.3} parent=59 // pred_region
        %s396 = smul.u32 %s22, %s21
        %s397 = smul.u32 4, %s396
        %p398 = scmp.lt.s32.totalorder %s397, 3
        %s399 = scalar_select %p398, %s397, 3
        %s400 = smul.addr %s399, 8
        %s401 = scalar_lea.vmem %s4, %s400
      $region64: #{_lambda_.3} parent=59 // pred_fallthru
        _
    $region60: #{_lambda_.3} parent=5 // pred_fallthru
      _
  $region6: #{_lambda_.3} parent=0 // loop_footer
    %s14 = sadd.s32 1, %s10
  $region7: #{_lambda_.3} parent=0 // loop_footer_branch
    %9 = sbr.rel target = $region3
  $region8: #{_lambda_.3} parent=0 // loop_exit
    _

</llo_original>
